<compile_context>
chip_gen: v5e
topology: v5e:2x2
jax: 0.10.0
libtpu: 0.0.40
codegen_flags: <defaults>
</compile_context>

<pallas_src>
import math
import functools

import jax
import jax.numpy as jnp
from jax.experimental import pallas as pl
from jax.experimental.pallas import tpu as pltpu


def _round_up(v: int, m: int) -> int:
    return ((v + m - 1) // m) * m


def _vmem_capacity_bytes() -> int:
    """Physical VMEM per TensorCore; conservative fallback if the query fails."""
    try:
        cap = int(getattr(pltpu.get_tpu_info(), "vmem_capacity_bytes", 0))
        if cap > 0:
            return cap
    except Exception:
        pass
    return 64 << 20  # v7x per-TC VMEM — the smallest of the supported chips


def _pick_tile(dim: int, align: int, cap: int) -> int:
    """Tile size for one dim.

    If the whole dim fits under `cap`, take it whole (block == full array dim
    is always a legal BlockSpec and needs no wrapper padding).  Otherwise take
    the largest `align`-multiple <= cap, preferring one that divides `dim`
    exactly (no padded copy) as long as it stays within 2x of the maximum.
    """
    if dim <= cap:
        return dim
    best = (cap // align) * align
    t = best
    while t >= max(align, best // 2):
        if dim % t == 0:
            return t
        t -= align
    return best


def _choose_tiles(M: int, N: int, K: int, in_itemsize: int, out_itemsize: int,
                  budget: int):
    # Sublane multiple for the block's second-to-last dims: 8 f32 / 16 bf16 / 32 int8.
    sub = max(8, 32 // in_itemsize)
    M_align = _round_up(M, sub)

    # M tile: small-M regime -> single M block (weight streamed exactly once);
    # otherwise a 256-multiple tile that keeps the 2x256x256 MXU cadence fed.
    tm = M_align if M_align <= 1024 else 512

    # K tile: lane-dense and as large as VMEM allows (fewer grid steps and
    # fewer f32 accumulator read-modify-writes).  Larger still when M is tiny.
    tk_cap = 4096 if M_align <= 256 else 2048
    tk = _pick_tile(K, 128, tk_cap)

    # N tile: lane-dense, 512 cap (multiple of 256).
    tn = _pick_tile(N, 128, 512)

    def footprint(tm_, tn_, tk_):
        return (2 * tm_ * tk_ * in_itemsize        # x tile, double-buffered
                + 2 * tk_ * tn_ * in_itemsize      # w tile, double-buffered
                + 2 * tn_ * 4                      # bias tile (f32)
                + 2 * tm_ * tn_ * out_itemsize     # output tile, double-buffered
                + tm_ * tn_ * 4)                   # f32 accumulator scratch

    # Shrink until the double-buffered working set fits the budget: K first,
    # then N, then M, then K again down to its floor.
    while footprint(tm, tn, tk) > budget and tk > 512:
        tk = _round_up(tk // 2, 128)
    while footprint(tm, tn, tk) > budget and tn > 128:
        tn = _round_up(tn // 2, 128)
    while footprint(tm, tn, tk) > budget and tm > sub:
        tm = max(sub, _round_up(tm // 2, sub))
    while footprint(tm, tn, tk) > budget and tk > 128:
        tk = _round_up(tk // 2, 128)

    # v7x has two TensorCores that shard the "parallel" grid axes: make sure
    # there are >= 2 output blocks when the output is wide enough to split
    # lane-densely (each half stays a multiple of 128 lanes).
    gm = (M + tm - 1) // tm
    gn = (N + tn - 1) // tn
    if gm * gn == 1 and tn >= 256 and tn % 256 == 0:
        tn //= 2

    return tm, tn, tk, footprint(tm, tn, tk)


def _equalized_linear_kernel(x_ref, w_ref, b_ref, o_ref, acc_ref, *, c):
    # x_ref: (tm, tk)   w_ref: (tk, tn)  [weight pre-transposed to (in, out)]
    # b_ref: (1, tn) f32   o_ref: (tm, tn)   acc_ref: (tm, tn) f32 scratch
    k = pl.program_id(2)

    @pl.when(k == 0)
    def _init():
        acc_ref[...] = jnp.zeros_like(acc_ref)

    # Standard (M,K)x(K,N) contraction: both operands hit the MXU in their
    # native dtype/layout, accumulation is f32.
    acc_ref[...] += jnp.dot(x_ref[...], w_ref[...],
                            preferred_element_type=jnp.float32)

    @pl.when(k == pl.num_programs(2) - 1)
    def _finalize():
        # y = (x @ w.T) * c + b  (c is a scalar) — applied exactly once.
        o_ref[...] = (acc_ref[...] * c + b_ref[...]).astype(o_ref.dtype)


def equalized_linear(x: jax.Array, weight: jax.Array, bias: jax.Array,
                     *, compute_dtype=None) -> jax.Array:
    """x: (..., in), weight: (out, in), bias: (out,) -> (..., out).

    compute_dtype: optionally cast MXU operands (e.g. jnp.bfloat16) for peak
    MXU throughput on v6e/v7x; accumulation stays f32.  Default keeps the
    caller's precision so results match the f32 reference bit-for-tolerance.
    """
    orig_shape = x.shape
    in_features = orig_shape[-1]
    out_features, in_features_w = weight.shape
    assert in_features == in_features_w, "x / weight in_features mismatch"

    # Consistent MXU operand dtype (avoids surprise promotion inside dot).
    dtype = jnp.promote_types(x.dtype, weight.dtype)
    if compute_dtype is not None:
        dtype = jnp.dtype(compute_dtype)

    x2d = x.reshape(-1, in_features).astype(dtype)
    # One-time XLA transpose so the kernel RHS is (K, N): contracting dim on
    # sublanes -> no per-tile transpose/relayout in front of the MXU.
    w_t = weight.astype(dtype).T                      # (in, out) = (K, N)

    M, K = x2d.shape
    N = out_features
    c = 1.0 / math.sqrt(float(in_features))           # uses the TRUE in_features

    in_item = jnp.dtype(dtype).itemsize
    out_item = in_item
    cap = _vmem_capacity_bytes()
    budget = max(8 << 20, int(cap * 0.55))
    tm, tn, tk, fp = _choose_tiles(M, N, K, in_item, out_item, budget)

    M_pad, N_pad, K_pad = _round_up(M, tm), _round_up(N, tn), _round_up(K, tk)

    x_p = x2d
    if (M_pad, K_pad) != (M, K):
        x_p = jnp.pad(x2d, ((0, M_pad - M), (0, K_pad - K)))
    w_p = w_t
    if (K_pad, N_pad) != (K, N):
        w_p = jnp.pad(w_t, ((0, K_pad - K), (0, N_pad - N)))
    b_p = bias.astype(jnp.float32)
    if N_pad != N:
        b_p = jnp.pad(b_p, (0, N_pad - N))
    b2d = b_p.reshape(1, N_pad)

    grid = (M_pad // tm, N_pad // tn, K_pad // tk)
    gm, gn, _ = grid

    # Bytes accessed reflecting re-streaming: x is re-read per N block, w per M block.
    bytes_accessed = (x_p.size * in_item * gn
                      + w_p.size * in_item * gm
                      + b2d.size * 4
                      + M_pad * N_pad * out_item)

    # Explicit scoped-VMEM limit (never rely on the 16/32 MiB defaults),
    # clamped below physical capacity with headroom for compiler scratch.
    vmem_limit = int(min(cap - (2 << 20), max(32 << 20, fp + (8 << 20))))

    kernel = functools.partial(_equalized_linear_kernel, c=c)

    out_padded = pl.pallas_call(
        kernel,
        out_shape=jax.ShapeDtypeStruct((M_pad, N_pad), dtype),
        grid_spec=pltpu.PrefetchScalarGridSpec(
            num_scalar_prefetch=0,
            grid=grid,
            in_specs=[
                pl.BlockSpec((tm, tk), lambda i, j, k: (i, k)),   # x tile
                pl.BlockSpec((tk, tn), lambda i, j, k: (k, j)),   # weight tile (in, out)
                pl.BlockSpec((1, tn), lambda i, j, k: (0, j)),    # bias tile
            ],
            out_specs=pl.BlockSpec((tm, tn), lambda i, j, k: (i, j)),
            scratch_shapes=[pltpu.VMEM((tm, tn), jnp.float32)],
        ),
        compiler_params=pltpu.CompilerParams(
            dimension_semantics=("parallel", "parallel", "arbitrary"),
            vmem_limit_bytes=vmem_limit,
        ),
        cost_estimate=pl.CostEstimate(
            flops=2 * M * N * K,
            transcendentals=0,
            bytes_accessed=int(bytes_accessed),
        ),
    )(x_p, w_p, b2d)

    y = out_padded[:M, :N]
    return y.reshape(*orig_shape[:-1], N)


if __name__ == "__main__":
    key = jax.random.PRNGKey(0)
    k_x, k_w = jax.random.split(key)

    batch = 8
    in_features = 32
    out_features = 32
    bias_init = 0.0  # matches EqualizedLinear default: bias = ones(out) * 0.0

    # Deterministic "parameters" (EqualizedWeight stores a standard-normal weight).
    x = jax.random.normal(k_x, (batch, in_features), dtype=jnp.float32)
    weight = jax.random.normal(k_w, (out_features, in_features), dtype=jnp.float32)
    bias = jnp.ones((out_features,), dtype=jnp.float32) * bias_init

    y = equalized_linear(x, weight, bias)
    y = jax.block_until_ready(y)

    # Reference check in plain JAX (same math as F.linear(x, w*c, bias)).
    c = 1.0 / math.sqrt(float(in_features))
    y_ref = x @ (weight * c).T + bias
    assert y.shape == (batch, out_features)
    assert jnp.allclose(y, y_ref, atol=1e-5, rtol=1e-5)

    print("KERNEL_OK")
</pallas_src>

<mosaic_0001>
module attributes {stable_mosaic.version = 11 : i64} {
  func.func @_equalized_linear_kernel(%arg0: i32, %arg1: i32, %arg2: i32, %arg3: memref<8x32xf32, #tpu.memory_space<vmem>>, %arg4: memref<32x32xf32, #tpu.memory_space<vmem>>, %arg5: memref<1x32xf32, #tpu.memory_space<vmem>>, %arg6: memref<8x32xf32, #tpu.memory_space<vmem>>, %arg7: memref<8x32xf32, #tpu.memory_space<vmem>>) attributes {dimension_semantics = [#tpu.dimension_semantics<parallel>, #tpu.dimension_semantics<parallel>, #tpu.dimension_semantics<arbitrary>], iteration_bounds = array<i64: 1, 1, 1>, scalar_prefetch = 0 : i64, scratch_operands = 1 : i64, tpu.core_type = #tpu.core_type<tc>, window_params = [{transform_indices = @transform_0, window_bounds = array<i64: 8, 32>}, {transform_indices = @transform_1, window_bounds = array<i64: 32, 32>}, {transform_indices = @transform_2, window_bounds = array<i64: 1, 32>}, {transform_indices = @transform_3, window_bounds = array<i64: 8, 32>}]} {
    %c0_i32 = arith.constant 0 : i32
    %0 = arith.cmpi eq, %arg2, %c0_i32 : i32
    %1 = arith.extui %0 : i1 to i32
    %c0_i32_0 = arith.constant 0 : i32
    %2 = arith.cmpi ne, %1, %c0_i32_0 : i32
    scf.if %2 {
      %cst_10 = arith.constant 0.000000e+00 : f32
      %12 = vector.broadcast %cst_10 : f32 to vector<8x32xf32>
      %c0_11 = arith.constant 0 : index
      %c0_12 = arith.constant 0 : index
      %13 = vector.load %arg7[%c0_11, %c0_12] : memref<8x32xf32, #tpu.memory_space<vmem>>, vector<8x32xf32>
      tpu.vector_store %arg7[%c0_11, %c0_12], %12 {strides = array<i32>} : memref<8x32xf32, #tpu.memory_space<vmem>>, vector<8x32xf32>,
    } else {
    }
    %c0 = arith.constant 0 : index
    %c0_1 = arith.constant 0 : index
    %3 = vector.load %arg7[%c0, %c0_1] : memref<8x32xf32, #tpu.memory_space<vmem>>, vector<8x32xf32>
    %c0_2 = arith.constant 0 : index
    %c0_3 = arith.constant 0 : index
    %4 = vector.load %arg3[%c0_2, %c0_3] : memref<8x32xf32, #tpu.memory_space<vmem>>, vector<8x32xf32>
    %c0_4 = arith.constant 0 : index
    %c0_5 = arith.constant 0 : index
    %5 = vector.load %arg4[%c0_4, %c0_5] : memref<32x32xf32, #tpu.memory_space<vmem>>, vector<32x32xf32>
    %cst = arith.constant dense<0.000000e+00> : vector<8x32xf32>
    %6 = tpu.matmul %4, %5, %cst {dimension_numbers = #tpu.dot_dimension_numbers<[1], [0], [0], [1], [0, 0, 1, 1], [], []>} : vector<8x32xf32>, vector<32x32xf32>, vector<8x32xf32> -> vector<8x32xf32>
    %7 = arith.addf %3, %6 : vector<8x32xf32>
    %c0_6 = arith.constant 0 : index
    %c0_7 = arith.constant 0 : index
    %8 = vector.load %arg7[%c0_6, %c0_7] : memref<8x32xf32, #tpu.memory_space<vmem>>, vector<8x32xf32>
    tpu.vector_store %arg7[%c0_6, %c0_7], %7 {strides = array<i32>} : memref<8x32xf32, #tpu.memory_space<vmem>>, vector<8x32xf32>,
    %c0_i32_8 = arith.constant 0 : i32
    %9 = arith.cmpi eq, %arg2, %c0_i32_8 : i32
    %10 = arith.extui %9 : i1 to i32
    %c0_i32_9 = arith.constant 0 : i32
    %11 = arith.cmpi ne, %10, %c0_i32_9 : i32
    scf.if %11 {
      %c0_10 = arith.constant 0 : index
      %c0_11 = arith.constant 0 : index
      %12 = vector.load %arg7[%c0_10, %c0_11] : memref<8x32xf32, #tpu.memory_space<vmem>>, vector<8x32xf32>
      %cst_12 = arith.constant 0.176776692 : f32
      %13 = vector.broadcast %cst_12 : f32 to vector<8x32xf32>
      %14 = arith.mulf %12, %13 : vector<8x32xf32>
      %c0_13 = arith.constant 0 : index
      %c0_14 = arith.constant 0 : index
      %15 = vector.load %arg5[%c0_13, %c0_14] : memref<1x32xf32, #tpu.memory_space<vmem>>, vector<1x32xf32>
      %16 = vector.broadcast %15 : vector<1x32xf32> to vector<8x32xf32>
      %17 = arith.addf %14, %16 : vector<8x32xf32>
      %c0_15 = arith.constant 0 : index
      %c0_16 = arith.constant 0 : index
      %18 = vector.load %arg6[%c0_15, %c0_16] : memref<8x32xf32, #tpu.memory_space<vmem>>, vector<8x32xf32>
      tpu.vector_store %arg6[%c0_15, %c0_16], %17 {strides = array<i32>} : memref<8x32xf32, #tpu.memory_space<vmem>>, vector<8x32xf32>,
    } else {
    }
    return
  }
  func.func @transform_0(%arg0: i32, %arg1: i32, %arg2: i32) -> (i32, i32) {
    %c0_i32 = arith.constant 0 : i32
    return %arg0, %arg2 : i32, i32
  }
  func.func @transform_1(%arg0: i32, %arg1: i32, %arg2: i32) -> (i32, i32) {
    %c0_i32 = arith.constant 0 : i32
    return %arg2, %arg1 : i32, i32
  }
  func.func @transform_2(%arg0: i32, %arg1: i32, %arg2: i32) -> (i32, i32) {
    %c0_i32 = arith.constant 0 : i32
    %c0_i32_0 = arith.constant 0 : i32
    return %c0_i32, %arg1 : i32, i32
  }
  func.func @transform_3(%arg0: i32, %arg1: i32, %arg2: i32) -> (i32, i32) {
    %c0_i32 = arith.constant 0 : i32
    return %arg0, %arg1 : i32, i32
  }
}

</mosaic_0001>

<llo_original>
// kernel: tpu_custom_call.1
$region0: #{tpu_custom_call.1}
  #allocation0 [shape = 'u32[]', space=smem, size = 0x4, offset = 0x4, fixed_abs, tag = 'smem constant byte address 0x4 - core index']
  #allocation1 [shape = 'u32[72,128]{1,0:T(1,128)}', space=vmem, size = 0x9000, scoped, tag = 'internal scratch']
  #allocation2 [shape = 'f32[8,32]{1,0:T(8,128)}', space=vmem, size = 0x1000, scoped, tag = 'scratch operand']
  %s0 = inlined_call_operand.hbm [shape: f32[8,32], index: 0, kind: input, shape index: {}]
  %s1 = inlined_call_operand.hbm [shape: f32[32,32], index: 1, kind: input, shape index: {}]
  %s2 = inlined_call_operand.vmem [shape: f32[1,32], index: 2, kind: input, shape index: {}]
  %s3 = inlined_call_operand.hbm [shape: f32[8,32], index: 3, kind: output, shape index: {}]
  %s4 = sld [smem:[#allocation0]]
  $region38: #{tpu_custom_call.1} parent=0
    _
  %s6 = ssub.s32 1, %s4
  %s7 = scalar_select 0, %s6, %s4
  $region1: #{tpu_custom_call.1} parent=0
    #allocation3 [shape = 'u8[4096]{0}', space=vmem, size = 0x1000, scoped, tag = 'input window, operand 0, single buffered']
    #allocation4 [shape = 's32[1]{0}', space=sflag, size = 0x4, scoped, tag = 'scoped memory for tpu_custom_call.1']
    #allocation5 [shape = 's32[1]{0}', space=sflag, size = 0x4, scoped, tag = 'scoped memory for tpu_custom_call.1']
    #allocation6 [shape = 'u8[16384]{0}', space=vmem, size = 0x4000, scoped, tag = 'input window, operand 1, single buffered']
    #allocation7 [shape = 's32[1]{0}', space=sflag, size = 0x4, scoped, tag = 'scoped memory for tpu_custom_call.1']
    #allocation8 [shape = 'u8[4096]{0}', space=vmem, size = 0x1000, scoped, tag = 'output window, operand 0, single buffered']
    %8 = vsyncpa [#allocation4], 0
    %9 = vsyncpa [#allocation7], 0
    %10 = vsyncpa [#allocation5], 0
    // Predicated region
    $region2: #{tpu_custom_call.1} parent=1 // pred_check
      _
    $region3: #{tpu_custom_call.1} parent=1 // pred_check_branch
      %12 = sbr.rel (0) target = $region5
    $region4: #{tpu_custom_call.1} parent=1 // pred_region
      %14 = vsyncadd [#allocation4], 0
      %s16 = sshll.u32 %s0, 4
      %s17 = int_to_ptr.hbm [resolvable:$true] %s16
      %s18 = sshll.u32 [#allocation3], 4
      %s19 = int_to_ptr.vmem [resolvable:$true] %s18
      %21 = dma.hbm_to_vmem [thread:$0]  %s17, 128, %s19, [#allocation4]
    $region5: #{tpu_custom_call.1} parent=1 // pred_fallthru
      _
    // Predicated region
    $region6: #{tpu_custom_call.1} parent=1 // pred_check
      _
    $region7: #{tpu_custom_call.1} parent=1 // pred_check_branch
      %23 = sbr.rel (0) target = $region9
    $region8: #{tpu_custom_call.1} parent=1 // pred_region
      %25 = vsyncadd [#allocation7], 0
      %s26 = sshll.u32 %s1, 4
      %s27 = int_to_ptr.hbm [resolvable:$true] %s26
      %s28 = sshll.u32 [#allocation6], 4
      %s29 = int_to_ptr.vmem [resolvable:$true] %s28
      %34 = dma.hbm_to_vmem [thread:$0]  %s27, 512, %s29, [#allocation7], 128, 128, 8
    $region9: #{tpu_custom_call.1} parent=1 // pred_fallthru
      _
    // Predicated region
    $region10: #{tpu_custom_call.1} parent=1 // pred_check
      _
    $region11: #{tpu_custom_call.1} parent=1 // pred_check_branch
      %36 = sbr.rel (0) target = $region13
    $region12: #{tpu_custom_call.1} parent=1 // pred_region
      _
    $region13: #{tpu_custom_call.1} parent=1 // pred_fallthru
      _
    // Predicated region
    $region14: #{tpu_custom_call.1} parent=1 // pred_check
      _
    $region15: #{tpu_custom_call.1} parent=1 // pred_check_branch
      %38 = sbr.rel (0) target = $region17
    $region16: #{tpu_custom_call.1} parent=1 // pred_region
      %40 = dma.done [#allocation4], 128
    $region17: #{tpu_custom_call.1} parent=1 // pred_fallthru
      _
    // Predicated region
    $region18: #{tpu_custom_call.1} parent=1 // pred_check
      _
    $region19: #{tpu_custom_call.1} parent=1 // pred_check_branch
      %42 = sbr.rel (0) target = $region21
    $region20: #{tpu_custom_call.1} parent=1 // pred_region
      %44 = dma.done [#allocation7], 512
    $region21: #{tpu_custom_call.1} parent=1 // pred_fallthru
      _
    %p45 = scmp.eq.s32.totalorder 0, 0
    // Predicated region
    $region22: #{tpu_custom_call.1} parent=1 // pred_check
      %p46 = pneg %p45
    $region23: #{tpu_custom_call.1} parent=1 // pred_check_branch
      %48 = sbr.rel (%p46) target = $region25
    $region24: #{tpu_custom_call.1} parent=1 // pred_region
      %vm49 = vcmask 261120
      %50 = vst.msk [vmem:[#allocation2] sm:$0xff] %vm49, 0.0
    $region25: #{tpu_custom_call.1} parent=1 // pred_fallthru
      _
    %v51 = vld [vmem:[#allocation2] sm:$0xff]
    %v52 = vld [vmem:[#allocation3] sm:$0xff]
    %v53 = vld [vmem:[#allocation6] sm:$0xff]
    %v54 = vld [vmem:[#allocation6 + $0x8] sm:$0xff]
    %v55 = vld [vmem:[#allocation6 + $0x10] sm:$0xff]
    %v56 = vld [vmem:[#allocation6 + $0x18] sm:$0xff]
    %vm57 = vcmask 261120
    %v59 = vsel %vm57, %v52, 0
    %61 = vmatpush.msra.mxu0 0.0
    %62 = vmatpush.msra.mxu0 0.0
    %63 = vmatpush.msra.mxu0 0.0
    %64 = vmatpush.msra.mxu0 0.0
    %65 = vmatpush.msra.mxu0 0.0
    %66 = vmatpush.msra.mxu0 0.0
    %67 = vmatpush.msra.mxu0 0.0
    %68 = vmatpush.msra.mxu0 0.0
    %69 = vmatpush.msra.mxu0 0.0
    %70 = vmatpush.msra.mxu0 0.0
    %71 = vmatpush.msra.mxu0 0.0
    %72 = vmatpush.msra.mxu0 0.0
    %73 = vmatpush.msra.mxu0 %v56
    %74 = vmatpush.msra.mxu0 %v55
    %75 = vmatpush.msra.mxu0 %v54
    %76 = vmatpush.msra.mxu0 %v53
    %77 = vmatmul.f32.gmra.mxu0 %v59
    %v78 = vpop.f32.mrf.mxu0
    %v79 = vadd.f32 0.0, %v78
    %80 = vdwg.mxu0
    %v81 = vadd.f32 %v51, %v79
    %82 = vst.msk [vmem:[#allocation2] sm:$0xff] %vm57, %v81
    // Predicated region
    $region26: #{tpu_custom_call.1} parent=1 // pred_check
      %p83 = pneg %p45
    $region27: #{tpu_custom_call.1} parent=1 // pred_check_branch
      %85 = sbr.rel (%p83) target = $region29
    $region28: #{tpu_custom_call.1} parent=1 // pred_region
      %v86 = vld [vmem:[#allocation2] sm:$0xff]
      %v87 = vmul.f32 %v86, 0.17677669
      %v88 = vld [vmem:[%s2] sm:$0x1]
      %v90 = vperm.slane %v88, 0
      %v92 = vadd.f32 %v87, %v90
      %93 = vst.msk [vmem:[#allocation8] sm:$0xff] %vm57, %v92
    $region29: #{tpu_custom_call.1} parent=1 // pred_fallthru
      _
    // Predicated region
    $region30: #{tpu_custom_call.1} parent=1 // pred_check
      _
    $region31: #{tpu_custom_call.1} parent=1 // pred_check_branch
      %95 = sbr.rel (0) target = $region33
    $region32: #{tpu_custom_call.1} parent=1 // pred_region
      %97 = vsyncadd [#allocation5], 0
      %s99 = sshll.u32 [#allocation8], 4
      %s100 = int_to_ptr.vmem [resolvable:$true] %s99
      %s101 = sshll.u32 %s3, 4
      %s102 = int_to_ptr.hbm [resolvable:$true] %s101
      %104 = dma.vmem_to_hbm [thread:$0]  %s100, 128, %s102, [#allocation5]
    $region33: #{tpu_custom_call.1} parent=1 // pred_fallthru
      _
    // Predicated region
    $region34: #{tpu_custom_call.1} parent=1 // pred_check
      _
    $region35: #{tpu_custom_call.1} parent=1 // pred_check_branch
      %106 = sbr.rel (0) target = $region37
    $region36: #{tpu_custom_call.1} parent=1 // pred_region
      %108 = dma.done [#allocation5], 128
    $region37: #{tpu_custom_call.1} parent=1 // pred_fallthru
      _
    %109 = vsyncpa [#allocation4], 1
    %110 = vsyncpa [#allocation7], 1
    %111 = vsyncpa [#allocation5], 1

</llo_original>
